<compile_context>
chip_gen: v5e
topology: v5e:2x2
jax: 0.10.0
libtpu: 0.0.40
codegen_flags: <defaults>
</compile_context>

<pallas_src>
import functools

import jax
import jax.numpy as jnp
from jax.experimental import pallas as pl
from jax.experimental.pallas import tpu as pltpu


def _dice_kernel(x_ref, tgt_ref, out_ref,
                 inter_acc, moda_acc, modb_acc,
                 *, c_keep, apply_softmax, hw, tile):
    n = pl.program_id(1)  # HW-tile (reduction) axis

    @pl.when(n == 0)
    def _():
        inter_acc[...] = jnp.zeros_like(inter_acc)
        moda_acc[...] = jnp.zeros_like(moda_acc)
        modb_acc[...] = jnp.zeros_like(modb_acc)

    x = x_ref[...].astype(jnp.float32)                 # (C, tile)
    if apply_softmax:
        # softmax over the class axis (torch softmax dim == 1 on NCHW)
        x = x - jnp.max(x, axis=0, keepdims=True)
        e = jnp.exp(x)
        x = e * pl.reciprocal(jnp.sum(e, axis=0, keepdims=True), approx=False)

    probs = x[:c_keep, :]                              # drop last class (c_keep, tile)
    tgt = tgt_ref[...].astype(jnp.int32)               # (1, tile)
    cls = jax.lax.broadcasted_iota(jnp.int32, probs.shape, 0)
    one_hot = (tgt == cls).astype(jnp.float32)         # (c_keep, tile)

    if hw % tile != 0:
        # mask lanes that fall in the wrapper-side padding of H*W
        lane = jax.lax.broadcasted_iota(jnp.int32, (1, tile), 1)
        valid = ((n * tile + lane) < hw).astype(jnp.float32)
        probs = probs * valid
        one_hot = one_hot * valid

    # lane-wide accumulation: pure VPU adds, no per-step cross-lane reduce
    inter_acc[...] += one_hot * probs
    moda_acc[...] += probs
    modb_acc[...] += one_hot

    @pl.when(n == pl.num_programs(1) - 1)
    def _():
        # one lane-reduction per batch, written as per-batch partial sums
        out_ref[:, 0:1] = jnp.sum(inter_acc[...], axis=1, keepdims=True)
        out_ref[:, 1:2] = jnp.sum(moda_acc[...], axis=1, keepdims=True)
        out_ref[:, 2:3] = jnp.sum(modb_acc[...], axis=1, keepdims=True)


def _pick_tile_hw(hw, num_classes, in_bytes, c_keep,
                  budget_bytes=12 * 1024 * 1024, cap=32768):
    """Largest lane tile (multiple of 128, <= cap) whose double-buffered inputs
    plus lane-wide accumulators fit a conservative VMEM budget."""
    per_lane = 2 * (num_classes * in_bytes + 4) + 3 * c_keep * 4
    t = min(cap, budget_bytes // per_lane)
    t = max(128, (t // 128) * 128)
    hw_pad128 = ((hw + 127) // 128) * 128
    return min(t, hw_pad128)


def multiclass_dice_loss(logits, targets, *, num_classes, softmax_dim=None,
                         smooth=1e-06, tile_hw=None):
    """Pallas implementation of MulticlassDiceLoss(num_classes, softmax_dim).forward
    (the reference always applies -dice.mean())."""
    assert softmax_dim in (None, 1), "only channel softmax (dim=1) supported"
    B, C, H, W = logits.shape
    assert C == num_classes
    c_keep = num_classes - 1
    HW = H * W

    in_bytes = jnp.dtype(logits.dtype).itemsize
    if tile_hw is None:
        tile_hw = _pick_tile_hw(HW, C, in_bytes, c_keep)
    hw_pad = -(-HW // tile_hw) * tile_hw

    # free views: no transpose, keep HBM dtype (bf16 stays bf16)
    x = logits.reshape(B, C, HW)
    tgt = targets.reshape(B, 1, HW).astype(jnp.int32)
    # TODO(synk): int8 targets would cut the targets HBM stream 4x; kept int32
    # for lowering safety with a sublane-1 block.
    if hw_pad != HW:
        x = jnp.pad(x, ((0, 0), (0, 0), (0, hw_pad - HW)))
        tgt = jnp.pad(tgt, ((0, 0), (0, 0), (0, hw_pad - HW)))

    kernel = functools.partial(
        _dice_kernel,
        c_keep=c_keep,
        apply_softmax=(softmax_dim is not None),
        hw=HW,
        tile=tile_hw,
    )

    # per-batch partial sums: (B, c_keep, 3) = [intersection, mod_a, mod_b]
    sums = pl.pallas_call(
        kernel,
        out_shape=jax.ShapeDtypeStruct((B, c_keep, 3), jnp.float32),
        grid_spec=pltpu.PrefetchScalarGridSpec(
            num_scalar_prefetch=0,
            grid=(B, hw_pad // tile_hw),
            in_specs=[
                pl.BlockSpec((pl.Squeezed(), C, tile_hw), lambda b, n: (b, 0, n)),
                pl.BlockSpec((pl.Squeezed(), 1, tile_hw), lambda b, n: (b, 0, n)),
            ],
            out_specs=pl.BlockSpec((pl.Squeezed(), c_keep, 3),
                                   lambda b, n: (b, 0, 0)),
            scratch_shapes=[
                pltpu.VMEM((c_keep, tile_hw), jnp.float32),
                pltpu.VMEM((c_keep, tile_hw), jnp.float32),
                pltpu.VMEM((c_keep, tile_hw), jnp.float32),
            ],
        ),
        compiler_params=pltpu.CompilerParams(
            dimension_semantics=("parallel", "arbitrary")),
    )(x, tgt)

    # tiny final combine (B * c_keep * 3 values) in plain JAX
    intersection = jnp.sum(sums[:, :, 0], axis=0)
    mod_a = jnp.sum(sums[:, :, 1], axis=0)
    mod_b = jnp.sum(sums[:, :, 2], axis=0)
    dice = 2.0 * intersection / (mod_a + mod_b + float(smooth))
    return -jnp.mean(dice)


def _reference_dice_loss(logits, targets, *, num_classes, softmax_dim=None,
                         smooth=1e-06):
    """Pure-JAX transcription of the PyTorch forward for verification."""
    probs = logits.astype(jnp.float32)
    if softmax_dim is not None:
        probs = jax.nn.softmax(probs, axis=softmax_dim)
    c_keep = num_classes - 1
    one_hot = jax.nn.one_hot(targets, num_classes, dtype=jnp.float32)  # (B,H,W,C)
    one_hot = jnp.transpose(one_hot, (0, 3, 1, 2))                     # (B,C,H,W)
    probs = probs[:, :c_keep, :, :]
    one_hot = one_hot[:, :c_keep, :, :]
    intersection = jnp.sum(one_hot * probs, axis=(0, 2, 3))
    mod_a = jnp.sum(probs, axis=(0, 2, 3))
    mod_b = jnp.sum(one_hot, axis=(0, 2, 3))
    dice = 2.0 * intersection / (mod_a + mod_b + smooth)
    return -jnp.mean(dice)


if __name__ == "__main__":
    num_classes = 4
    B, H, W = 2, 16, 16

    key = jax.random.PRNGKey(0)
    k_logits, k_tgt = jax.random.split(key)
    logits = jax.random.normal(k_logits, (B, num_classes, H, W), dtype=jnp.float32)
    targets = jax.random.randint(k_tgt, (B, H, W), 0, num_classes, dtype=jnp.int32)

    ok = True
    for softmax_dim in (None, 1):  # module default is None; also test softmax path
        loss = multiclass_dice_loss(
            logits, targets, num_classes=num_classes, softmax_dim=softmax_dim)
        loss = jax.block_until_ready(loss)
        ref = _reference_dice_loss(
            logits, targets, num_classes=num_classes, softmax_dim=softmax_dim)
        ok &= bool(jnp.allclose(loss, ref, atol=1e-5, rtol=1e-5))

    if ok:
        print("KERNEL_OK")
    else:
        print("KERNEL_MISMATCH")
</pallas_src>

<mosaic_0001>
module attributes {stable_mosaic.version = 11 : i64} {
  func.func @_dice_kernel(%arg0: i32, %arg1: i32, %arg2: memref<1x4x256xf32, #tpu.memory_space<vmem>>, %arg3: memref<1x1x256xi32, #tpu.memory_space<vmem>>, %arg4: memref<1x3x3xf32, #tpu.memory_space<vmem>>, %arg5: memref<3x256xf32, #tpu.memory_space<vmem>>, %arg6: memref<3x256xf32, #tpu.memory_space<vmem>>, %arg7: memref<3x256xf32, #tpu.memory_space<vmem>>) attributes {dimension_semantics = [#tpu.dimension_semantics<parallel>, #tpu.dimension_semantics<arbitrary>], iteration_bounds = array<i64: 2, 1>, scalar_prefetch = 0 : i64, scratch_operands = 3 : i64, tpu.core_type = #tpu.core_type<tc>, window_params = [{transform_indices = @transform_0, window_bounds = array<i64: 1, 4, 256>}, {transform_indices = @transform_1, window_bounds = array<i64: 1, 1, 256>}, {transform_indices = @transform_2, window_bounds = array<i64: 1, 3, 3>}]} {
    %c0_i32 = arith.constant 0 : i32
    %0 = arith.cmpi eq, %arg1, %c0_i32 : i32
    %1 = arith.extui %0 : i1 to i32
    %c0_i32_0 = arith.constant 0 : i32
    %2 = arith.cmpi ne, %1, %c0_i32_0 : i32
    scf.if %2 {
      %cst = arith.constant 0.000000e+00 : f32
      %26 = vector.broadcast %cst : f32 to vector<3x256xf32>
      %c0_20 = arith.constant 0 : index
      %c0_21 = arith.constant 0 : index
      %27 = vector.load %arg5[%c0_20, %c0_21] : memref<3x256xf32, #tpu.memory_space<vmem>>, vector<3x256xf32>
      tpu.vector_store %arg5[%c0_20, %c0_21], %26 {strides = array<i32>} : memref<3x256xf32, #tpu.memory_space<vmem>>, vector<3x256xf32>,
      %cst_22 = arith.constant 0.000000e+00 : f32
      %28 = vector.broadcast %cst_22 : f32 to vector<3x256xf32>
      %c0_23 = arith.constant 0 : index
      %c0_24 = arith.constant 0 : index
      %29 = vector.load %arg6[%c0_23, %c0_24] : memref<3x256xf32, #tpu.memory_space<vmem>>, vector<3x256xf32>
      tpu.vector_store %arg6[%c0_23, %c0_24], %28 {strides = array<i32>} : memref<3x256xf32, #tpu.memory_space<vmem>>, vector<3x256xf32>,
      %cst_25 = arith.constant 0.000000e+00 : f32
      %30 = vector.broadcast %cst_25 : f32 to vector<3x256xf32>
      %c0_26 = arith.constant 0 : index
      %c0_27 = arith.constant 0 : index
      %31 = vector.load %arg7[%c0_26, %c0_27] : memref<3x256xf32, #tpu.memory_space<vmem>>, vector<3x256xf32>
      tpu.vector_store %arg7[%c0_26, %c0_27], %30 {strides = array<i32>} : memref<3x256xf32, #tpu.memory_space<vmem>>, vector<3x256xf32>,
    } else {
    }
    %c0 = arith.constant 0 : index
    %c0_1 = arith.constant 0 : index
    %c0_2 = arith.constant 0 : index
    %3 = vector.load %arg2[%c0, %c0_1, %c0_2] : memref<1x4x256xf32, #tpu.memory_space<vmem>>, vector<1x4x256xf32>
    %4 = vector.shape_cast %3 : vector<1x4x256xf32> to vector<4x256xf32>
    %5 = vector.extract_strided_slice %4 {offsets = [0, 0], sizes = [3, 256], strides = [1, 1]} : vector<4x256xf32> to vector<3x256xf32>
    %c0_3 = arith.constant 0 : index
    %c0_4 = arith.constant 0 : index
    %c0_5 = arith.constant 0 : index
    %6 = vector.load %arg3[%c0_3, %c0_4, %c0_5] : memref<1x1x256xi32, #tpu.memory_space<vmem>>, vector<1x1x256xi32>
    %7 = vector.shape_cast %6 : vector<1x1x256xi32> to vector<1x256xi32>
    %8 = tpu.iota {dimensions = array<i32: 0>} : vector<3x256xi32>
    %9 = vector.broadcast %7 : vector<1x256xi32> to vector<3x256xi32>
    %10 = arith.cmpi eq, %9, %8 : vector<3x256xi32>
    %11 = arith.extui %10 : vector<3x256xi1> to vector<3x256xi32>
    %12 = arith.sitofp %11 : vector<3x256xi32> to vector<3x256xf32>
    %c0_6 = arith.constant 0 : index
    %c0_7 = arith.constant 0 : index
    %13 = vector.load %arg5[%c0_6, %c0_7] : memref<3x256xf32, #tpu.memory_space<vmem>>, vector<3x256xf32>
    %14 = arith.mulf %12, %5 : vector<3x256xf32>
    %15 = arith.addf %13, %14 : vector<3x256xf32>
    %c0_8 = arith.constant 0 : index
    %c0_9 = arith.constant 0 : index
    %16 = vector.load %arg5[%c0_8, %c0_9] : memref<3x256xf32, #tpu.memory_space<vmem>>, vector<3x256xf32>
    tpu.vector_store %arg5[%c0_8, %c0_9], %15 {strides = array<i32>} : memref<3x256xf32, #tpu.memory_space<vmem>>, vector<3x256xf32>,
    %c0_10 = arith.constant 0 : index
    %c0_11 = arith.constant 0 : index
    %17 = vector.load %arg6[%c0_10, %c0_11] : memref<3x256xf32, #tpu.memory_space<vmem>>, vector<3x256xf32>
    %18 = arith.addf %17, %5 : vector<3x256xf32>
    %c0_12 = arith.constant 0 : index
    %c0_13 = arith.constant 0 : index
    %19 = vector.load %arg6[%c0_12, %c0_13] : memref<3x256xf32, #tpu.memory_space<vmem>>, vector<3x256xf32>
    tpu.vector_store %arg6[%c0_12, %c0_13], %18 {strides = array<i32>} : memref<3x256xf32, #tpu.memory_space<vmem>>, vector<3x256xf32>,
    %c0_14 = arith.constant 0 : index
    %c0_15 = arith.constant 0 : index
    %20 = vector.load %arg7[%c0_14, %c0_15] : memref<3x256xf32, #tpu.memory_space<vmem>>, vector<3x256xf32>
    %21 = arith.addf %20, %12 : vector<3x256xf32>
    %c0_16 = arith.constant 0 : index
    %c0_17 = arith.constant 0 : index
    %22 = vector.load %arg7[%c0_16, %c0_17] : memref<3x256xf32, #tpu.memory_space<vmem>>, vector<3x256xf32>
    tpu.vector_store %arg7[%c0_16, %c0_17], %21 {strides = array<i32>} : memref<3x256xf32, #tpu.memory_space<vmem>>, vector<3x256xf32>,
    %c0_i32_18 = arith.constant 0 : i32
    %23 = arith.cmpi eq, %arg1, %c0_i32_18 : i32
    %24 = arith.extui %23 : i1 to i32
    %c0_i32_19 = arith.constant 0 : i32
    %25 = arith.cmpi ne, %24, %c0_i32_19 : i32
    scf.if %25 {
      %c0_20 = arith.constant 0 : index
      %c0_21 = arith.constant 0 : index
      %26 = vector.load %arg5[%c0_20, %c0_21] : memref<3x256xf32, #tpu.memory_space<vmem>>, vector<3x256xf32>
      %cst = arith.constant dense<0.000000e+00> : vector<3xf32>
      %27 = vector.multi_reduction <add>, %26, %cst [1] : vector<3x256xf32> to vector<3xf32>
      %28 = vector.shape_cast %27 : vector<3xf32> to vector<3x1xf32>
      %c0_22 = arith.constant 0 : index
      %c0_23 = arith.constant 0 : index
      %c0_24 = arith.constant 0 : index
      %29 = vector.load %arg4[%c0_22, %c0_23, %c0_24] : memref<1x3x3xf32, #tpu.memory_space<vmem>>, vector<1x3x1xf32>
      %30 = vector.shape_cast %29 : vector<1x3x1xf32> to vector<3x1xf32>
      %31 = vector.shape_cast %28 : vector<3x1xf32> to vector<1x3x1xf32>
      tpu.vector_store %arg4[%c0_22, %c0_23, %c0_24], %31 {strides = array<i32>} : memref<1x3x3xf32, #tpu.memory_space<vmem>>, vector<1x3x1xf32>,
      %c0_25 = arith.constant 0 : index
      %c0_26 = arith.constant 0 : index
      %32 = vector.load %arg6[%c0_25, %c0_26] : memref<3x256xf32, #tpu.memory_space<vmem>>, vector<3x256xf32>
      %cst_27 = arith.constant dense<0.000000e+00> : vector<3xf32>
      %33 = vector.multi_reduction <add>, %32, %cst_27 [1] : vector<3x256xf32> to vector<3xf32>
      %34 = vector.shape_cast %33 : vector<3xf32> to vector<3x1xf32>
      %c0_28 = arith.constant 0 : index
      %c0_29 = arith.constant 0 : index
      %c1 = arith.constant 1 : index
      %35 = vector.load %arg4[%c0_28, %c0_29, %c1] : memref<1x3x3xf32, #tpu.memory_space<vmem>>, vector<1x3x1xf32>
      %36 = vector.shape_cast %35 : vector<1x3x1xf32> to vector<3x1xf32>
      %37 = vector.shape_cast %34 : vector<3x1xf32> to vector<1x3x1xf32>
      tpu.vector_store %arg4[%c0_28, %c0_29, %c1], %37 {strides = array<i32>} : memref<1x3x3xf32, #tpu.memory_space<vmem>>, vector<1x3x1xf32>,
      %c0_30 = arith.constant 0 : index
      %c0_31 = arith.constant 0 : index
      %38 = vector.load %arg7[%c0_30, %c0_31] : memref<3x256xf32, #tpu.memory_space<vmem>>, vector<3x256xf32>
      %cst_32 = arith.constant dense<0.000000e+00> : vector<3xf32>
      %39 = vector.multi_reduction <add>, %38, %cst_32 [1] : vector<3x256xf32> to vector<3xf32>
      %40 = vector.shape_cast %39 : vector<3xf32> to vector<3x1xf32>
      %c0_33 = arith.constant 0 : index
      %c0_34 = arith.constant 0 : index
      %c2 = arith.constant 2 : index
      %41 = vector.load %arg4[%c0_33, %c0_34, %c2] : memref<1x3x3xf32, #tpu.memory_space<vmem>>, vector<1x3x1xf32>
      %42 = vector.shape_cast %41 : vector<1x3x1xf32> to vector<3x1xf32>
      %43 = vector.shape_cast %40 : vector<3x1xf32> to vector<1x3x1xf32>
      tpu.vector_store %arg4[%c0_33, %c0_34, %c2], %43 {strides = array<i32>} : memref<1x3x3xf32, #tpu.memory_space<vmem>>, vector<1x3x1xf32>,
    } else {
    }
    return
  }
  func.func @transform_0(%arg0: i32, %arg1: i32) -> (i32, i32, i32) {
    %c0_i32 = arith.constant 0 : i32
    %c0_i32_0 = arith.constant 0 : i32
    return %arg0, %c0_i32, %arg1 : i32, i32, i32
  }
  func.func @transform_1(%arg0: i32, %arg1: i32) -> (i32, i32, i32) {
    %c0_i32 = arith.constant 0 : i32
    %c0_i32_0 = arith.constant 0 : i32
    return %arg0, %c0_i32, %arg1 : i32, i32, i32
  }
  func.func @transform_2(%arg0: i32, %arg1: i32) -> (i32, i32, i32) {
    %c0_i32 = arith.constant 0 : i32
    %c0_i32_0 = arith.constant 0 : i32
    %c0_i32_1 = arith.constant 0 : i32
    return %arg0, %c0_i32, %c0_i32_0 : i32, i32, i32
  }
}

</mosaic_0001>

<llo_original>
// kernel: tpu_custom_call.1
$region0: #{tpu_custom_call.1}
  #allocation0 [shape = 'u32[]', space=smem, size = 0x4, offset = 0x4, fixed_abs, tag = 'smem constant byte address 0x4 - core index']
  #allocation1 [shape = 'u32[72,128]{1,0:T(1,128)}', space=vmem, size = 0x9000, scoped, tag = 'internal scratch']
  #allocation2 [shape = 'f32[3,256]{1,0:T(4,128)}', space=vmem, size = 0x1000, scoped, tag = 'scratch operand']
  #allocation3 [shape = 'f32[3,256]{1,0:T(4,128)}', space=vmem, size = 0x1000, scoped, tag = 'scratch operand']
  #allocation4 [shape = 'f32[3,256]{1,0:T(4,128)}', space=vmem, size = 0x1000, scoped, tag = 'scratch operand']
  %s0 = inlined_call_operand.hbm [shape: f32[2,4,256], index: 0, kind: input, shape index: {}]
  %s1 = inlined_call_operand.hbm [shape: s32[2,1,256], index: 1, kind: input, shape index: {}]
  %s2 = inlined_call_operand.vmem [shape: f32[2,3,3], index: 2, kind: output, shape index: {}]
  %s3 = sld [smem:[#allocation0]]
  $region57: #{tpu_custom_call.1} parent=0
    _
  %s5 = ssub.s32 1, %s3
  %s6 = scalar_select 0, %s5, %s3
  $region1: #{tpu_custom_call.1} parent=0
    #allocation5 [shape = 'u8[8192]{0}', space=vmem, size = 0x2000, scoped, tag = 'input window, operand 0']
    #allocation6 [shape = 's32[2]{0}', space=sflag, size = 0x8, scoped, tag = 'scoped memory for tpu_custom_call.1']
    #allocation7 [shape = 'u8[2048]{0}', space=vmem, size = 0x800, scoped, tag = 'input window, operand 1']
    #allocation8 [shape = 's32[2]{0}', space=sflag, size = 0x8, scoped, tag = 'scoped memory for tpu_custom_call.1']
    %7 = vsyncpa [#allocation6], 0
    %s8 = scalar_lea.sflag [#allocation6], 1
    %9 = vsyncpa %s8, 0
    %10 = vsyncpa [#allocation8], 0
    %s11 = scalar_lea.sflag [#allocation8], 1
    %12 = vsyncpa %s11, 0
    loop: start=0, step=1, limit=4
    $region2: #{tpu_custom_call.1} parent=1 // loop_pre_header
      _
    $region3: #{tpu_custom_call.1} parent=1 // loop_header
      %s14 = sphi 0, %s18
      %p15 = scmp.ge.s32.totalorder %s14, 4
      %s21 = sphi 0, %s33
      %s22 = sphi 0, %s29
      %s23 = sphi 0, %s21
      %s24 = sphi 0, %s22
      %s25 = sphi 0, %s23
      %s26 = sphi 0, %s24
      %s38 = sphi 0, %s40
      %s41 = sphi 0, %s38
      %s42 = sphi 0, %s41
      %s58 = sphi 0, %s42
      %s66 = sphi 0, %s68
      %s69 = sphi 0, %s66
      %s70 = sphi 0, %s69
      %s86 = sphi 0, %s70
      %s92 = sphi 0, %s94
      %s95 = sphi 0, %s92
      %s96 = sphi 0, %s95
      %s112 = sphi 0, %s96
    $region4: #{tpu_custom_call.1} parent=1 // loop_header_branch
      %17 = sbr.rel (%p15) target = $region8
    $region5: #{tpu_custom_call.1} parent=1 // loop_body
      %s19 = ssub.s32 %s14, 1
      %s20 = ssub.s32 %s14, 2
      %s27 = sadd.s32 1, %s22
      %p28 = scmp.ge.s32.totalorder %s27, 1
      %s29 = scalar_select %p28, 0, %s27
      %s30 = sadd.s32 1, %s21
      %s31 = scalar_select %p28, %s30, %s21
      %p32 = scmp.ge.s32.totalorder %s31, 2
      %s33 = scalar_select %p32, 0, %s31
      %s34 = ssub.s32 %s21, %s33
      %s35 = ssub.s32 %s22, %s29
      %s36 = sor.u32 %s34, %s35
      %p37 = scmp.eq.s32.totalorder %s36, 0
      %s39 = sadd.s32 %s38, 1
      %s40 = scalar_select %p37, %s38, %s39
      %p43 = pneg %p37
      %p44 = scmp.eq.s32.totalorder %s14, 1
      %p45 = por %p43, %p44
      %p46 = scmp.ne.s32.totalorder %s38, %s41
      %p47 = scmp.eq.s32.totalorder %s14, 0
      %p48 = por %p46, %p47
      %p49 = scmp.ne.s32.totalorder %s38, %s41
      %p50 = scmp.eq.s32.totalorder %s19, 1
      %p51 = por %p49, %p50
      %p52 = scmp.ne.s32.totalorder %s41, %s42
      %p53 = scmp.eq.s32.totalorder %s19, 0
      %p54 = por %p52, %p53
      %p55 = scmp.ne.s32.totalorder %s41, %s42
      %p56 = scmp.eq.s32.totalorder %s20, 1
      %p57 = por %p55, %p56
      %p59 = scmp.ne.s32.totalorder %s42, %s58
      %p60 = scmp.eq.s32.totalorder %s20, 0
      %p61 = por %p59, %p60
      %s62 = ssub.s32 %s21, %s33
      %s63 = ssub.s32 %s22, %s29
      %s64 = sor.u32 %s62, %s63
      %p65 = scmp.eq.s32.totalorder %s64, 0
      %s67 = sadd.s32 %s66, 1
      %s68 = scalar_select %p65, %s66, %s67
      %p71 = pneg %p65
      %p72 = scmp.eq.s32.totalorder %s14, 1
      %p73 = por %p71, %p72
      %p74 = scmp.ne.s32.totalorder %s66, %s69
      %p75 = scmp.eq.s32.totalorder %s14, 0
      %p76 = por %p74, %p75
      %p77 = scmp.ne.s32.totalorder %s66, %s69
      %p78 = scmp.eq.s32.totalorder %s19, 1
      %p79 = por %p77, %p78
      %p80 = scmp.ne.s32.totalorder %s69, %s70
      %p81 = scmp.eq.s32.totalorder %s19, 0
      %p82 = por %p80, %p81
      %p83 = scmp.ne.s32.totalorder %s69, %s70
      %p84 = scmp.eq.s32.totalorder %s20, 1
      %p85 = por %p83, %p84
      %p87 = scmp.ne.s32.totalorder %s70, %s86
      %p88 = scmp.eq.s32.totalorder %s20, 0
      %p89 = por %p87, %p88
      %s90 = ssub.s32 %s21, %s33
      %p91 = scmp.eq.s32.totalorder %s90, 0
      %s93 = sadd.s32 %s92, 1
      %s94 = scalar_select %p91, %s92, %s93
      %p97 = pneg %p91
      %p98 = scmp.eq.s32.totalorder %s14, 1
      %p99 = por %p97, %p98
      %p100 = scmp.ne.s32.totalorder %s92, %s95
      %p101 = scmp.eq.s32.totalorder %s14, 0
      %p102 = por %p100, %p101
      %p103 = scmp.ne.s32.totalorder %s92, %s95
      %p104 = scmp.eq.s32.totalorder %s19, 1
      %p105 = por %p103, %p104
      %p106 = scmp.ne.s32.totalorder %s95, %s96
      %p107 = scmp.eq.s32.totalorder %s19, 0
      %p108 = por %p106, %p107
      %p109 = scmp.ne.s32.totalorder %s95, %s96
      %p110 = scmp.eq.s32.totalorder %s20, 1
      %p111 = por %p109, %p110
      %p113 = scmp.ne.s32.totalorder %s96, %s112
      %p114 = scmp.eq.s32.totalorder %s20, 0
      %p115 = por %p113, %p114
      %p116 = scmp.le.s32.totalorder 1, %s14
      %p117 = scmp.lt.s32.totalorder %s14, 3
      %p118 = pnand %p116, %p117
      %p119 = pneg %p118
      // Predicated region
      $region9: #{tpu_custom_call.1} parent=5 // pred_check
        _
      $region10: #{tpu_custom_call.1} parent=5 // pred_check_branch
        %121 = sbr.rel (%p118) target = $region12
      $region11: #{tpu_custom_call.1} parent=5 // pred_region
        %s122 = ssub.s32 %s14, 1
      $region12: #{tpu_custom_call.1} parent=5 // pred_fallthru
        _
      %p123 = scmp.lt.s32.totalorder %s14, 2
      // Predicated region
      $region13: #{tpu_custom_call.1} parent=5 // pred_check
        %p124 = pneg %p123
      $region14: #{tpu_custom_call.1} parent=5 // pred_check_branch
        %126 = sbr.rel (%p124) target = $region16
      $region15: #{tpu_custom_call.1} parent=5 // pred_region
        // Predicated region
        $region17: #{tpu_custom_call.1} parent=15 // pred_check
          %p127 = pneg %p48
        $region18: #{tpu_custom_call.1} parent=15 // pred_check_branch
          %129 = sbr.rel (%p127) target = $region20
        $region19: #{tpu_custom_call.1} parent=15 // pred_region
          %s130 = sand.u32 %s38, 1
          %s131 = scalar_lea.sflag [#allocation6], %s130
          %s132 = sand.u32 %s38, 1
          %s133 = smul.addr %s132, 8
          %s134 = scalar_lea.vmem [#allocation5], %s133
          %s135 = smul.u32 2, %s22
          %137 = vsyncadd %s131, 0
          %s138 = smul.addr %s21, 2
          %s139 = sadd.s32 %s135, %s138
          %s140 = smul.addr %s139, 4
          %s141 = scalar_lea.hbm %s0, %s140
          %s143 = sshll.u32 %s141, 4
          %s144 = int_to_ptr.hbm [resolvable:$true] %s143
          %s145 = sshll.u32 %s134, 4
          %s146 = int_to_ptr.vmem [resolvable:$true] %s145
          %148 = dma.hbm_to_vmem [thread:$0]  %s144, 128, %s146, %s131
        $region20: #{tpu_custom_call.1} parent=15 // pred_fallthru
          _
        // Predicated region
        $region21: #{tpu_custom_call.1} parent=15 // pred_check
          %p149 = pneg %p76
        $region22: #{tpu_custom_call.1} parent=15 // pred_check_branch
          %151 = sbr.rel (%p149) target = $region24
        $region23: #{tpu_custom_call.1} parent=15 // pred_region
          %s152 = sand.u32 %s66, 1
          %s153 = scalar_lea.sflag [#allocation8], %s152
          %s154 = sand.u32 %s66, 1
          %s155 = smul.addr %s154, 2
          %s156 = scalar_lea.vmem [#allocation7], %s155
          %s157 = smul.u32 2, %s22
          %159 = vsyncadd %s153, 0
          %s160 = smul.addr %s21, 2
          %s161 = sadd.s32 %s157, %s160
          %s162 = scalar_lea.hbm %s1, %s161
          %s164 = sshll.u32 %s162, 4
          %s165 = int_to_ptr.hbm [resolvable:$true] %s164
          %s166 = sshll.u32 %s156, 4
          %s167 = int_to_ptr.vmem [resolvable:$true] %s166
          %169 = dma.hbm_to_vmem [thread:$0]  %s165, 32, %s167, %s153
        $region24: #{tpu_custom_call.1} parent=15 // pred_fallthru
          _
      $region16: #{tpu_custom_call.1} parent=5 // pred_fallthru
        _
      %p170 = scmp.le.s32.totalorder 1, %s14
      %p171 = scmp.lt.s32.totalorder %s14, 3
      %p172 = pnand %p170, %p171
      %p173 = pneg %p172
      // Predicated region
      $region25: #{tpu_custom_call.1} parent=5 // pred_check
        _
      $region26: #{tpu_custom_call.1} parent=5 // pred_check_branch
        %175 = sbr.rel (%p172) target = $region28
      $region27: #{tpu_custom_call.1} parent=5 // pred_region
        %s176 = ssub.s32 %s14, 1
        %s177 = sand.u32 %s41, 1
        %s178 = scalar_lea.sflag [#allocation6], %s177
        %s179 = sand.u32 %s41, 1
        %s180 = smul.addr %s179, 8
        %s181 = scalar_lea.vmem [#allocation5], %s180
        // Predicated region
        $region29: #{tpu_custom_call.1} parent=27 // pred_check
          %p182 = pneg %p54
        $region30: #{tpu_custom_call.1} parent=27 // pred_check_branch
          %184 = sbr.rel (%p182) target = $region32
        $region31: #{tpu_custom_call.1} parent=27 // pred_region
          %186 = dma.done %s178, 128
        $region32: #{tpu_custom_call.1} parent=27 // pred_fallthru
          _
        %s187 = sand.u32 %s69, 1
        %s188 = scalar_lea.sflag [#allocation8], %s187
        %s189 = sand.u32 %s69, 1
        %s190 = smul.addr %s189, 2
        %s191 = scalar_lea.vmem [#allocation7], %s190
        // Predicated region
        $region33: #{tpu_custom_call.1} parent=27 // pred_check
          %p192 = pneg %p82
        $region34: #{tpu_custom_call.1} parent=27 // pred_check_branch
          %194 = sbr.rel (%p192) target = $region36
        $region35: #{tpu_custom_call.1} parent=27 // pred_region
          %196 = dma.done %s188, 32
        $region36: #{tpu_custom_call.1} parent=27 // pred_fallthru
          _
        %s197 = sand.u32 %s41, 1
        %s198 = scalar_lea.sflag [#allocation6], %s197
        %s199 = sand.u32 %s41, 1
        %s200 = smul.addr %s199, 8
        %s201 = scalar_lea.vmem [#allocation5], %s200
        %p202 = pneg %p54
        %p203 = pneg %p51
        %s204 = sand.u32 %s69, 1
        %s205 = scalar_lea.sflag [#allocation8], %s204
        %s206 = sand.u32 %s69, 1
        %s207 = smul.addr %s206, 2
        %s208 = scalar_lea.vmem [#allocation7], %s207
        %p209 = pneg %p82
        %p210 = pneg %p79
        %p211 = pneg %p108
        %p212 = pneg %p105
        %p213 = scmp.lt.s32.totalorder %s23, 1
        %s214 = scalar_select %p213, %s23, 1
        %s215 = smul.addr %s214, 4
        %s216 = scalar_lea.vmem %s2, %s215
        %s217 = smul.u32 2, %s24
        %s218 = smul.u32 2, %s24
        %p219 = scmp.lt.s32.totalorder %s23, 1
        %s220 = scalar_select %p219, %s23, 1
        %s221 = smul.addr %s220, 4
        %s222 = scalar_lea.vmem %s2, %s221
        %p223 = scmp.eq.s32.totalorder %s24, 0
        // Predicated region
        $region37: #{tpu_custom_call.1} parent=27 // pred_check
          %p224 = pneg %p223
        $region38: #{tpu_custom_call.1} parent=27 // pred_check_branch
          %226 = sbr.rel (%p224) target = $region40
        $region39: #{tpu_custom_call.1} parent=27 // pred_region
          %227 = vst [vmem:[#allocation2] sm:$0x77] 0.0
          %228 = vst [vmem:[#allocation3] sm:$0x77] 0.0
          %229 = vst [vmem:[#allocation4] sm:$0x77] 0.0
        $region40: #{tpu_custom_call.1} parent=27 // pred_fallthru
          _
        %v230 = vld [vmem:[%s181] sm:$0xff]
        %v231 = vld [vmem:[%s191] sm:$0x3]
        %v232 = vlaneseq
        %v233 = vshrl.u32 %v232, 7
        %v234 = vperm.slane %v231, 0
        %v235 = vperm.slane %v231, 1
        %vm236 = vcmp.eq.s32.totalorder %v234, %v233
        %vm237 = vcmp.eq.s32.totalorder %v235, %v233
        %v238 = vsel %vm236, 1, 0
        %v239 = vsel %vm237, 1, 0
        %v240 = vcvt.s32.f32 %v238
        %v241 = vcvt.s32.f32 %v239
        %v242 = vld [vmem:[#allocation2] sm:$0x77]
        %244 = vst [vmem:[#allocation1] ss:$2 sm:$0xff] %v230
        %v245 = vld.sshfl [vmem:[#allocation1] sm:$0xff pattern:$0x75316420]
        %v246 = vld.sshfl [vmem:[#allocation1 + $0x8] sm:$0xff pattern:$0x75316420]
        %v249 = vmul.f32 %v240, %v245
        %v250 = vmul.f32 %v241, %v246
        %v253 = vrot.slane %v250, 4
        %vm254 = vcmask 1043456
        %v255 = vsel %vm254, %v249, %v253
        %v257 = vadd.f32 %v242, %v255
        %258 = vst [vmem:[#allocation2] sm:$0x77] %v257
        %v259 = vld [vmem:[#allocation3] sm:$0x77]
        %v260 = vadd.f32 %v259, %v230
        %261 = vst [vmem:[#allocation3] sm:$0x77] %v260
        %v262 = vld [vmem:[#allocation4] sm:$0x77]
        %v265 = vrot.slane %v241, 4
        %v266 = vsel %vm254, %v240, %v265
        %v268 = vadd.f32 %v262, %v266
        %269 = vst [vmem:[#allocation4] sm:$0x77] %v268
        // Predicated region
        $region41: #{tpu_custom_call.1} parent=27 // pred_check
          %p270 = pneg %p223
        $region42: #{tpu_custom_call.1} parent=27 // pred_check_branch
          %272 = sbr.rel (%p270) target = $region44
        $region43: #{tpu_custom_call.1} parent=27 // pred_region
          %v273 = vld [vmem:[#allocation2] sm:$0x77]
          %275 = vst [vmem:[#allocation1] ss:$2 sm:$0xff] %v273
          %v276 = vld.sshfl [vmem:[#allocation1] sm:$0xff pattern:$0x75316420]
          %v277 = vld.sshfl [vmem:[#allocation1 + $0x8] sm:$0xff pattern:$0x75316420]
          %vm280 = vcmask 1042432
          %v281 = vsel %vm280, %v276, 0.0
          %v282 = vsel %vm280, %v277, 0.0
          %v283 = vadd.f32 %v281, %v282
          %284 = vadd.xlane.f32.xlu0 %v283
          %v285 = vpop.xlane.xlu0 %284
          %vm286 = vcmask 2048
          %287 = vst.msk [vmem:[%s222] sm:$0x7] %vm286, %v285
          %v288 = vld [vmem:[#allocation3] sm:$0x77]
          %290 = vst [vmem:[#allocation1] ss:$2 sm:$0xff] %v288
          %v291 = vld.sshfl [vmem:[#allocation1] sm:$0xff pattern:$0x75316420]
          %v292 = vld.sshfl [vmem:[#allocation1 + $0x8] sm:$0xff pattern:$0x75316420]
          %v295 = vsel %vm280, %v291, 0.0
          %v296 = vsel %vm280, %v292, 0.0
          %v297 = vadd.f32 %v295, %v296
          %298 = vadd.xlane.f32.xlu0 %v297
          %v299 = vpop.xlane.xlu0 %298
          %vm300 = vcmask 10248
          %301 = vst.msk [vmem:[%s222] sm:$0x7] %vm300, %v299
          %v302 = vld [vmem:[#allocation4] sm:$0x77]
          %304 = vst [vmem:[#allocation1] ss:$2 sm:$0xff] %v302
          %v305 = vld.sshfl [vmem:[#allocation1] sm:$0xff pattern:$0x75316420]
          %v306 = vld.sshfl [vmem:[#allocation1 + $0x8] sm:$0xff pattern:$0x75316420]
          %v309 = vsel %vm280, %v305, 0.0
          %v310 = vsel %vm280, %v306, 0.0
          %v311 = vadd.f32 %v309, %v310
          %312 = vadd.xlane.f32.xlu0 %v311
          %v313 = vpop.xlane.xlu0 %312
          %vm314 = vcmask 18448
          %315 = vst.msk [vmem:[%s222] sm:$0x7] %vm314, %v313
        $region44: #{tpu_custom_call.1} parent=27 // pred_fallthru
          _
        %p316 = scmp.lt.s32.totalorder %s23, 1
        %s317 = scalar_select %p316, %s23, 1
        %s318 = smul.addr %s317, 4
        %s319 = scalar_lea.vmem %s2, %s318
        // Predicated region
        $region45: #{tpu_custom_call.1} parent=27 // pred_check
          %p320 = pneg %p105
        $region46: #{tpu_custom_call.1} parent=27 // pred_check_branch
          %322 = sbr.rel (%p320) target = $region48
        $region47: #{tpu_custom_call.1} parent=27 // pred_region
          _
        $region48: #{tpu_custom_call.1} parent=27 // pred_fallthru
          _
      $region28: #{tpu_custom_call.1} parent=5 // pred_fallthru
        _
      %p323 = scmp.le.s32.totalorder 2, %s14
      // Predicated region
      $region49: #{tpu_custom_call.1} parent=5 // pred_check
        %p324 = pneg %p323
      $region50: #{tpu_custom_call.1} parent=5 // pred_check_branch
        %326 = sbr.rel (%p324) target = $region52
      $region51: #{tpu_custom_call.1} parent=5 // pred_region
        %s327 = ssub.s32 %s14, 2
        // Predicated region
        $region53: #{tpu_custom_call.1} parent=51 // pred_check
          %p328 = pneg %p111
        $region54: #{tpu_custom_call.1} parent=51 // pred_check_branch
          %330 = sbr.rel (%p328) target = $region56
        $region55: #{tpu_custom_call.1} parent=51 // pred_region
          %p331 = scmp.lt.s32.totalorder %s25, 1
          %s332 = scalar_select %p331, %s25, 1
          %s333 = smul.addr %s332, 4
          %s334 = scalar_lea.vmem %s2, %s333
        $region56: #{tpu_custom_call.1} parent=51 // pred_fallthru
          _
      $region52: #{tpu_custom_call.1} parent=5 // pred_fallthru
        _
    $region6: #{tpu_custom_call.1} parent=1 // loop_footer
      %s18 = sadd.s32 1, %s14
    $region7: #{tpu_custom_call.1} parent=1 // loop_footer_branch
      %13 = sbr.rel target = $region3
    $region8: #{tpu_custom_call.1} parent=1 // loop_exit
      _
    %335 = vsyncpa [#allocation6], 1
    %s336 = scalar_lea.sflag [#allocation6], 1
    %337 = vsyncpa %s336, 1
    %338 = vsyncpa [#allocation8], 1
    %s339 = scalar_lea.sflag [#allocation8], 1
    %340 = vsyncpa %s339, 1

</llo_original>
